<compile_context>
chip_gen: v7x
topology: tpu7x:2x2x1
jax: 0.10.0
libtpu: 0.0.40
codegen_flags: <defaults>
</compile_context>

<pallas_src>
import functools
import math

import jax
import jax.numpy as jnp
from jax.experimental import pallas as pl
from jax.experimental.pallas import tpu as pltpu


def _round_up(x, m):
    return ((x + m - 1) // m) * m


def _tpu_generation():
    try:
        kind = jax.devices()[0].device_kind.lower()
    except Exception:
        return "unknown"
    if "v7" in kind:
        return "v7x"
    if "v6" in kind:
        return "v6e"
    if "v5" in kind:
        return "v5e"
    return "unknown"


def _ffn_kernel(x_ref, w1_ref, b1_ref, w2_ref, b2_ref, o_ref, *scratch, acc_in_out):
    # x_ref:  (tm, dim_p)   token rows (resident across the hidden axis)
    # w1_ref: (dim_p, tk)   hidden-block of W1
    # b1_ref: (1, tk)       hidden-block of b1 (f32)
    # w2_ref: (tk, dim_p)   hidden-block of W2
    # b2_ref: (1, dim_p)    b2 (f32, constant)
    # o_ref:  (tm, dim_p)   output tile (resident across the hidden axis)
    # scratch: () if acc_in_out else (f32 accumulator,)
    k = pl.program_id(1)
    acc_ref = o_ref if acc_in_out else scratch[0]

    @pl.when(k == 0)
    def _():
        acc_ref[...] = jnp.zeros_like(acc_ref)

    # First matmul + bias + ReLU for this hidden block; f32 accumulation on the MXU.
    h = jnp.dot(x_ref[...].astype(w1_ref.dtype), w1_ref[...],
                preferred_element_type=jnp.float32)
    h = jnp.maximum(h + b1_ref[...], 0.0)
    # TODO(synk): dropout with p > 0 would need pltpu.prng_seed/prng_random_bits; p == 0 here.
    acc_ref[...] += jnp.dot(h.astype(w2_ref.dtype), w2_ref[...],
                            preferred_element_type=jnp.float32)

    @pl.when(k == pl.num_programs(1) - 1)
    def _():
        if acc_in_out:
            o_ref[...] = o_ref[...] + b2_ref[...].astype(o_ref.dtype)
        else:
            o_ref[...] = (acc_ref[...] + b2_ref[...]).astype(o_ref.dtype)


def make_feed_forward(w1, b1, w2, b2, *, compute_dtype=jnp.bfloat16, block_h=512,
                      dropout=0.0):
    """Pads/casts the FFN parameters once and returns a jitted `apply(x)` closure.

    w1: [dim, hidden]  b1: [hidden]  w2: [hidden, dim]  b2: [dim]
    (torch.nn.Linear stores (out, in); we use the transposed (in, out) layout so the
    kernel computes y = x @ W directly.)
    """
    assert dropout == 0.0, "dropout > 0 is not supported by the fused inference kernel"
    dim, hidden = w1.shape
    assert w2.shape == (hidden, dim) and b1.shape == (hidden,) and b2.shape == (dim,)

    gen = _tpu_generation()
    # Per-generation VMEM budget with headroom (128 MiB physical on v5e/v6e, 64 on v7x).
    budget = {"v5e": 100, "v6e": 100, "v7x": 48}.get(gen, 48) * 1024 * 1024
    # v6e/v7x MXU is 2x256x256 -> 256-wide output / contraction; v5e MXU is 128-wide.
    lane_align = 256 if (gen != "v5e" and dim > 128) else 128

    dim_p = _round_up(dim, lane_align)
    tk = min(block_h, _round_up(hidden, 128))        # hidden block, multiple of 128
    hidden_p = _round_up(hidden, tk)

    # Hoisted out of the per-call path: pad + cast parameters exactly once.
    w1_p = jnp.pad(w1, ((0, dim_p - dim), (0, hidden_p - hidden))).astype(compute_dtype)
    w2_p = jnp.pad(w2, ((0, hidden_p - hidden), (0, dim_p - dim))).astype(compute_dtype)
    b1_p = jnp.pad(b1.astype(jnp.float32).reshape(1, hidden),
                   ((0, 0), (0, hidden_p - hidden)))
    b2_p = jnp.pad(b2.astype(jnp.float32).reshape(1, dim), ((0, 0), (0, dim_p - dim)))
    cb = w1_p.dtype.itemsize

    @jax.jit
    def apply(x):
        assert x.shape[-1] == dim, f"expected last dim {dim}, got {x.shape[-1]}"
        lead = x.shape[:-1]
        n = math.prod(lead)
        out_dtype = x.dtype
        xb = jnp.dtype(out_dtype).itemsize
        ob = xb
        # f32 output -> accumulate straight into the resident output tile (no scratch).
        acc_in_out = out_dtype == jnp.float32

        def vmem_needed(tm):
            return (2 * tm * dim_p * xb                        # x tiles (double-buffered)
                    + 2 * dim_p * tk * cb                      # W1 hidden blocks
                    + 2 * tk * dim_p * cb                      # W2 hidden blocks
                    + 2 * (tk + dim_p) * 4                     # biases
                    + 2 * tm * dim_p * ob                      # output tiles
                    + (0 if acc_in_out else tm * dim_p * 4)    # f32 accumulator scratch
                    + tm * tk * 4)                             # h intermediate (f32)

        # Largest row tile that fits the per-generation VMEM budget (cuts weight re-reads).
        tm_cap = _round_up(max(n, 1), 128)
        tm = 128
        for cand in (2048, 1024, 512, 256):
            if cand <= tm_cap and vmem_needed(cand) * 1.25 <= budget:
                tm = cand
                break
        needed = vmem_needed(tm)
        vmem_limit = max(int(needed * 1.3), 32 * 1024 * 1024)
        if vmem_limit > budget:
            vmem_limit = max(budget, int(needed * 1.1))

        n_p = _round_up(n, tm)
        x2 = x.reshape(n, dim)
        if n_p != n or dim_p != dim:
            x2 = jnp.pad(x2, ((0, n_p - n), (0, dim_p - dim)))

        grid = (n_p // tm, hidden_p // tk)
        row_sem = (pltpu.CORE_PARALLEL if (gen == "v7x" and grid[0] >= 2)
                   else pltpu.PARALLEL)

        cost = pl.CostEstimate(
            flops=4 * n_p * dim_p * hidden_p,          # two matmuls, 2*M*K*N each
            transcendentals=0,
            # Honest HBM traffic: weights are re-streamed once per row tile.
            bytes_accessed=int(n_p * dim_p * (xb + ob)
                               + (w1_p.size + w2_p.size) * cb * grid[0]
                               + (hidden_p + dim_p) * 4),
        )

        out2 = pl.pallas_call(
            functools.partial(_ffn_kernel, acc_in_out=acc_in_out),
            out_shape=jax.ShapeDtypeStruct((n_p, dim_p), out_dtype),
            grid_spec=pltpu.PrefetchScalarGridSpec(
                num_scalar_prefetch=0,
                grid=grid,
                in_specs=[
                    pl.BlockSpec((tm, dim_p), lambda i, k: (i, 0)),   # x rows (resident over k)
                    pl.BlockSpec((dim_p, tk), lambda i, k: (0, k)),   # W1 hidden block
                    pl.BlockSpec((1, tk), lambda i, k: (0, k)),       # b1 hidden block
                    pl.BlockSpec((tk, dim_p), lambda i, k: (k, 0)),   # W2 hidden block
                    pl.BlockSpec((1, dim_p), lambda i, k: (0, 0)),    # b2
                ],
                out_specs=pl.BlockSpec((tm, dim_p), lambda i, k: (i, 0)),
                scratch_shapes=(() if acc_in_out
                                else (pltpu.VMEM((tm, dim_p), jnp.float32),)),
            ),
            compiler_params=pltpu.CompilerParams(
                dimension_semantics=(row_sem, pltpu.ARBITRARY),
                vmem_limit_bytes=int(vmem_limit),
            ),
            cost_estimate=cost,
        )(x2, w1_p, b1_p, w2_p, b2_p)

        if n_p != n or dim_p != dim:
            out2 = out2[:n, :dim]
        return out2.reshape(*lead, dim)

    return apply


def reference_ffn(x, w1, b1, w2, b2):
    h = jnp.maximum(x @ w1 + b1, 0.0)
    return h @ w2 + b2


if __name__ == "__main__":
    # Small shapes consistent with the module: tokens of width `dim`.
    batch, seq, dim, hidden_dim = 2, 8, 32, 64

    key = jax.random.PRNGKey(0)
    kx, kw1, kb1, kw2, kb2 = jax.random.split(key, 5)

    x = jax.random.normal(kx, (batch, seq, dim), dtype=jnp.float32)

    bound1 = 1.0 / jnp.sqrt(dim)
    bound2 = 1.0 / jnp.sqrt(hidden_dim)
    w1 = jax.random.uniform(kw1, (dim, hidden_dim), jnp.float32, -bound1, bound1)
    b1 = jax.random.uniform(kb1, (hidden_dim,), jnp.float32, -bound1, bound1)
    w2 = jax.random.uniform(kw2, (hidden_dim, dim), jnp.float32, -bound2, bound2)
    b2 = jax.random.uniform(kb2, (dim,), jnp.float32, -bound2, bound2)

    ref = reference_ffn(x, w1, b1, w2, b2)

    # 1) f32 compute path (exercises the accumulate-into-o_ref branch), tight tolerance.
    ffn_f32 = make_feed_forward(w1, b1, w2, b2, compute_dtype=jnp.float32)
    out_f32 = jax.block_until_ready(ffn_f32(x))
    assert out_f32.shape == x.shape
    assert jnp.allclose(out_f32, ref, atol=1e-5, rtol=1e-5), "f32 mismatch vs reference"

    # 2) bf16 MXU path (perf default: bf16 weights/activations, f32 accumulation).
    ffn_bf16 = make_feed_forward(w1, b1, w2, b2)  # compute_dtype=bf16
    out_bf16 = jax.block_until_ready(ffn_bf16(x))
    assert out_bf16.shape == x.shape
    assert jnp.allclose(out_bf16, ref, atol=3e-2, rtol=3e-2), "bf16 mismatch vs reference"

    # 3) bf16 activations/output (exercises the f32-scratch accumulator branch).
    out_bf_act = jax.block_until_ready(ffn_bf16(x.astype(jnp.bfloat16)))
    assert out_bf_act.shape == x.shape and out_bf_act.dtype == jnp.bfloat16
    assert jnp.allclose(out_bf_act.astype(jnp.float32), ref, atol=1e-1, rtol=1e-1), \
        "bf16-activation mismatch vs reference"

    print("KERNEL_OK")
</pallas_src>

<mosaic_0001>
module attributes {stable_mosaic.version = 11 : i64} {
  func.func @_ffn_kernel(%arg0: i32, %arg1: i32, %arg2: memref<128x128xf32, #tpu.memory_space<vmem>>, %arg3: memref<128x128xf32, #tpu.memory_space<vmem>>, %arg4: memref<1x128xf32, #tpu.memory_space<vmem>>, %arg5: memref<128x128xf32, #tpu.memory_space<vmem>>, %arg6: memref<1x128xf32, #tpu.memory_space<vmem>>, %arg7: memref<128x128xf32, #tpu.memory_space<vmem>>) attributes {dimension_semantics = [#tpu.dimension_semantics<parallel>, #tpu.dimension_semantics<arbitrary>], iteration_bounds = array<i64: 1, 1>, scalar_prefetch = 0 : i64, scratch_operands = 0 : i64, tpu.core_type = #tpu.core_type<tc>, window_params = [{transform_indices = @transform_0, window_bounds = array<i64: 128, 128>}, {transform_indices = @transform_1, window_bounds = array<i64: 128, 128>}, {transform_indices = @transform_2, window_bounds = array<i64: 1, 128>}, {transform_indices = @transform_3, window_bounds = array<i64: 128, 128>}, {pipeline_mode = #tpu.pipeline_mode<synchronous>, transform_indices = @transform_4, window_bounds = array<i64: 1, 128>}, {transform_indices = @transform_5, window_bounds = array<i64: 128, 128>}]} {
    %c0_i32 = arith.constant 0 : i32
    %0 = arith.cmpi eq, %arg1, %c0_i32 : i32
    %1 = arith.extui %0 : i1 to i32
    %c0_i32_0 = arith.constant 0 : i32
    %2 = arith.cmpi ne, %1, %c0_i32_0 : i32
    scf.if %2 {
      %cst_16 = arith.constant 0.000000e+00 : f32
      %19 = vector.broadcast %cst_16 : f32 to vector<128x128xf32>
      %c0_17 = arith.constant 0 : index
      %c0_18 = arith.constant 0 : index
      %20 = vector.load %arg7[%c0_17, %c0_18] : memref<128x128xf32, #tpu.memory_space<vmem>>, vector<128x128xf32>
      tpu.vector_store %arg7[%c0_17, %c0_18], %19 {strides = array<i32>} : memref<128x128xf32, #tpu.memory_space<vmem>>, vector<128x128xf32>,
    } else {
    }
    %c0 = arith.constant 0 : index
    %c0_1 = arith.constant 0 : index
    %3 = vector.load %arg2[%c0, %c0_1] : memref<128x128xf32, #tpu.memory_space<vmem>>, vector<128x128xf32>
    %c0_2 = arith.constant 0 : index
    %c0_3 = arith.constant 0 : index
    %4 = vector.load %arg3[%c0_2, %c0_3] : memref<128x128xf32, #tpu.memory_space<vmem>>, vector<128x128xf32>
    %cst = arith.constant dense<0.000000e+00> : vector<128x128xf32>
    %5 = tpu.matmul %3, %4, %cst {dimension_numbers = #tpu.dot_dimension_numbers<[1], [0], [0], [1], [0, 0, 1, 1], [], []>} : vector<128x128xf32>, vector<128x128xf32>, vector<128x128xf32> -> vector<128x128xf32>
    %c0_4 = arith.constant 0 : index
    %c0_5 = arith.constant 0 : index
    %6 = vector.load %arg4[%c0_4, %c0_5] : memref<1x128xf32, #tpu.memory_space<vmem>>, vector<1x128xf32>
    %7 = vector.broadcast %6 : vector<1x128xf32> to vector<128x128xf32>
    %8 = arith.addf %5, %7 : vector<128x128xf32>
    %cst_6 = arith.constant 0.000000e+00 : f32
    %9 = vector.broadcast %cst_6 : f32 to vector<128x128xf32>
    %10 = arith.maximumf %8, %9 : vector<128x128xf32>
    %c0_7 = arith.constant 0 : index
    %c0_8 = arith.constant 0 : index
    %11 = vector.load %arg7[%c0_7, %c0_8] : memref<128x128xf32, #tpu.memory_space<vmem>>, vector<128x128xf32>
    %c0_9 = arith.constant 0 : index
    %c0_10 = arith.constant 0 : index
    %12 = vector.load %arg5[%c0_9, %c0_10] : memref<128x128xf32, #tpu.memory_space<vmem>>, vector<128x128xf32>
    %cst_11 = arith.constant dense<0.000000e+00> : vector<128x128xf32>
    %13 = tpu.matmul %10, %12, %cst_11 {dimension_numbers = #tpu.dot_dimension_numbers<[1], [0], [0], [1], [0, 0, 1, 1], [], []>} : vector<128x128xf32>, vector<128x128xf32>, vector<128x128xf32> -> vector<128x128xf32>
    %14 = arith.addf %11, %13 : vector<128x128xf32>
    %c0_12 = arith.constant 0 : index
    %c0_13 = arith.constant 0 : index
    %15 = vector.load %arg7[%c0_12, %c0_13] : memref<128x128xf32, #tpu.memory_space<vmem>>, vector<128x128xf32>
    tpu.vector_store %arg7[%c0_12, %c0_13], %14 {strides = array<i32>} : memref<128x128xf32, #tpu.memory_space<vmem>>, vector<128x128xf32>,
    %c0_i32_14 = arith.constant 0 : i32
    %16 = arith.cmpi eq, %arg1, %c0_i32_14 : i32
    %17 = arith.extui %16 : i1 to i32
    %c0_i32_15 = arith.constant 0 : i32
    %18 = arith.cmpi ne, %17, %c0_i32_15 : i32
    scf.if %18 {
      %c0_16 = arith.constant 0 : index
      %c0_17 = arith.constant 0 : index
      %19 = vector.load %arg7[%c0_16, %c0_17] : memref<128x128xf32, #tpu.memory_space<vmem>>, vector<128x128xf32>
      %c0_18 = arith.constant 0 : index
      %c0_19 = arith.constant 0 : index
      %20 = vector.load %arg6[%c0_18, %c0_19] : memref<1x128xf32, #tpu.memory_space<vmem>>, vector<1x128xf32>
      %21 = vector.broadcast %20 : vector<1x128xf32> to vector<128x128xf32>
      %22 = arith.addf %19, %21 : vector<128x128xf32>
      %c0_20 = arith.constant 0 : index
      %c0_21 = arith.constant 0 : index
      %23 = vector.load %arg7[%c0_20, %c0_21] : memref<128x128xf32, #tpu.memory_space<vmem>>, vector<128x128xf32>
      tpu.vector_store %arg7[%c0_20, %c0_21], %22 {strides = array<i32>} : memref<128x128xf32, #tpu.memory_space<vmem>>, vector<128x128xf32>,
    } else {
    }
    return
  }
  func.func @transform_0(%arg0: i32, %arg1: i32) -> (i32, i32) {
    %c0_i32 = arith.constant 0 : i32
    %c0_i32_0 = arith.constant 0 : i32
    return %arg0, %c0_i32 : i32, i32
  }
  func.func @transform_1(%arg0: i32, %arg1: i32) -> (i32, i32) {
    %c0_i32 = arith.constant 0 : i32
    %c0_i32_0 = arith.constant 0 : i32
    return %c0_i32, %arg1 : i32, i32
  }
  func.func @transform_2(%arg0: i32, %arg1: i32) -> (i32, i32) {
    %c0_i32 = arith.constant 0 : i32
    %c0_i32_0 = arith.constant 0 : i32
    return %c0_i32, %arg1 : i32, i32
  }
  func.func @transform_3(%arg0: i32, %arg1: i32) -> (i32, i32) {
    %c0_i32 = arith.constant 0 : i32
    %c0_i32_0 = arith.constant 0 : i32
    return %arg1, %c0_i32 : i32, i32
  }
  func.func @transform_4(%arg0: i32, %arg1: i32) -> (i32, i32) {
    %c0_i32 = arith.constant 0 : i32
    %c0_i32_0 = arith.constant 0 : i32
    %c0_i32_1 = arith.constant 0 : i32
    return %c0_i32, %c0_i32_0 : i32, i32
  }
  func.func @transform_5(%arg0: i32, %arg1: i32) -> (i32, i32) {
    %c0_i32 = arith.constant 0 : i32
    %c0_i32_0 = arith.constant 0 : i32
    return %arg0, %c0_i32 : i32, i32
  }
}

</mosaic_0001>

<llo_original>
// kernel: apply.1
$region0: #{apply.1}
  #allocation0 [shape = 'u32[]', space=smem, size = 0x4, offset = 0x4, fixed_abs, tag = 'smem constant byte address 0x4 - core index']
  #allocation1 [shape = 'u32[144,128]{1,0:T(1,128)}', space=vmem, size = 0x12000, scoped, tag = 'internal scratch']
  %s0 = inlined_call_operand.vmem [shape: f32[128,128], index: 0, kind: input, shape index: {}]
  %s1 = inlined_call_operand.hbm [shape: f32[128,128], index: 1, kind: input, shape index: {}]
  %s2 = inlined_call_operand.vmem [shape: f32[1,128], index: 2, kind: input, shape index: {}]
  %s3 = inlined_call_operand.vmem [shape: f32[128,128], index: 3, kind: input, shape index: {}]
  %s4 = inlined_call_operand.vmem [shape: f32[1,128], index: 4, kind: input, shape index: {}]
  %s5 = inlined_call_operand.vmem [shape: f32[128,128], index: 5, kind: output, shape index: {}]
  %s6 = sld [smem:[#allocation0]]
  $region42: #{apply.1} parent=0
    _
  %s8 = ssub.s32 1, %s6
  %s9 = scalar_select 0, %s8, %s6
  $region1: #{apply.1} parent=0
    #allocation2 [shape = 'u8[65536]{0}', space=vmem, size = 0x10000, scoped, tag = 'input window, operand 1, single buffered']
    #allocation3 [shape = 's32[1]{0}', space=sflag, size = 0x4, scoped, tag = 'scoped memory for apply.1']
    %10 = vsyncpa [#allocation3], 0
    // Predicated region
    $region2: #{apply.1} parent=1 // pred_check
      _
    $region3: #{apply.1} parent=1 // pred_check_branch
      %12 = sbr.rel (0) target = $region5
    $region4: #{apply.1} parent=1 // pred_region
      _
    $region5: #{apply.1} parent=1 // pred_fallthru
      _
    // Predicated region
    $region6: #{apply.1} parent=1 // pred_check
      _
    $region7: #{apply.1} parent=1 // pred_check_branch
      %14 = sbr.rel (0) target = $region9
    $region8: #{apply.1} parent=1 // pred_region
      %s16 = ssub.s32 2048, 2048
      %17 = vsyncadd [#allocation3], %s16
      %s18 = sshll.u32 [#allocation2], 4
      %s19 = int_to_ptr.vmem [resolvable:$true] %s18
      %24 = dma.hbm_to_vmem [thread:$0]  %s1, 2048, %s19, [#allocation3], 128, 128, 8
    $region9: #{apply.1} parent=1 // pred_fallthru
      _
    // Predicated region
    $region10: #{apply.1} parent=1 // pred_check
      _
    $region11: #{apply.1} parent=1 // pred_check_branch
      %26 = sbr.rel (0) target = $region13
    $region12: #{apply.1} parent=1 // pred_region
      _
    $region13: #{apply.1} parent=1 // pred_fallthru
      _
    // Predicated region
    $region14: #{apply.1} parent=1 // pred_check
      _
    $region15: #{apply.1} parent=1 // pred_check_branch
      %28 = sbr.rel (0) target = $region17
    $region16: #{apply.1} parent=1 // pred_region
      _
    $region17: #{apply.1} parent=1 // pred_fallthru
      _
    // Predicated region
    $region18: #{apply.1} parent=1 // pred_check
      _
    $region19: #{apply.1} parent=1 // pred_check_branch
      %30 = sbr.rel (0) target = $region21
    $region20: #{apply.1} parent=1 // pred_region
      _
    $region21: #{apply.1} parent=1 // pred_fallthru
      _
    // Predicated region
    $region22: #{apply.1} parent=1 // pred_check
      _
    $region23: #{apply.1} parent=1 // pred_check_branch
      %32 = sbr.rel (0) target = $region25
    $region24: #{apply.1} parent=1 // pred_region
      %33 = dma.done [#allocation3], 2048
    $region25: #{apply.1} parent=1 // pred_fallthru
      _
    %p34 = scmp.eq.s32.totalorder 0, 0
    // Predicated region
    $region26: #{apply.1} parent=1 // pred_check
      %p35 = pneg %p34
    $region27: #{apply.1} parent=1 // pred_check_branch
      %37 = sbr.rel (%p35) target = $region29
    $region28: #{apply.1} parent=1 // pred_region
      %38 = vst [vmem:[%s5] sm:$0xff] 0.0
      %39 = vst [vmem:[%s5 + $0x8] sm:$0xff] 0.0
      %40 = vst [vmem:[%s5 + $0x10] sm:$0xff] 0.0
      %41 = vst [vmem:[%s5 + $0x18] sm:$0xff] 0.0
      %42 = vst [vmem:[%s5 + $0x20] sm:$0xff] 0.0
      %43 = vst [vmem:[%s5 + $0x28] sm:$0xff] 0.0
      %44 = vst [vmem:[%s5 + $0x30] sm:$0xff] 0.0
      %45 = vst [vmem:[%s5 + $0x38] sm:$0xff] 0.0
      %46 = vst [vmem:[%s5 + $0x40] sm:$0xff] 0.0
      %47 = vst [vmem:[%s5 + $0x48] sm:$0xff] 0.0
      %48 = vst [vmem:[%s5 + $0x50] sm:$0xff] 0.0
      %49 = vst [vmem:[%s5 + $0x58] sm:$0xff] 0.0
      %50 = vst [vmem:[%s5 + $0x60] sm:$0xff] 0.0
      %51 = vst [vmem:[%s5 + $0x68] sm:$0xff] 0.0
      %52 = vst [vmem:[%s5 + $0x70] sm:$0xff] 0.0
      %53 = vst [vmem:[%s5 + $0x78] sm:$0xff] 0.0
    $region29: #{apply.1} parent=1 // pred_fallthru
      _
    %v54 = vld [vmem:[%s0] sm:$0xff]
    %v55 = vld [vmem:[%s0 + $0x8] sm:$0xff]
    %v56 = vld [vmem:[%s0 + $0x10] sm:$0xff]
    %v57 = vld [vmem:[%s0 + $0x18] sm:$0xff]
    %v58 = vld [vmem:[%s0 + $0x20] sm:$0xff]
    %v59 = vld [vmem:[%s0 + $0x28] sm:$0xff]
    %v60 = vld [vmem:[%s0 + $0x30] sm:$0xff]
    %v61 = vld [vmem:[%s0 + $0x38] sm:$0xff]
    %v62 = vld [vmem:[%s0 + $0x40] sm:$0xff]
    %v63 = vld [vmem:[%s0 + $0x48] sm:$0xff]
    %v64 = vld [vmem:[%s0 + $0x50] sm:$0xff]
    %v65 = vld [vmem:[%s0 + $0x58] sm:$0xff]
    %v66 = vld [vmem:[%s0 + $0x60] sm:$0xff]
    %v67 = vld [vmem:[%s0 + $0x68] sm:$0xff]
    %v68 = vld [vmem:[%s0 + $0x70] sm:$0xff]
    %v69 = vld [vmem:[%s0 + $0x78] sm:$0xff]
    %v70 = vld [vmem:[#allocation2] sm:$0xff]
    %v71 = vld [vmem:[#allocation2 + $0x8] sm:$0xff]
    %v72 = vld [vmem:[#allocation2 + $0x10] sm:$0xff]
    %v73 = vld [vmem:[#allocation2 + $0x18] sm:$0xff]
    %v74 = vld [vmem:[#allocation2 + $0x20] sm:$0xff]
    %v75 = vld [vmem:[#allocation2 + $0x28] sm:$0xff]
    %v76 = vld [vmem:[#allocation2 + $0x30] sm:$0xff]
    %v77 = vld [vmem:[#allocation2 + $0x38] sm:$0xff]
    %v78 = vld [vmem:[#allocation2 + $0x40] sm:$0xff]
    %v79 = vld [vmem:[#allocation2 + $0x48] sm:$0xff]
    %v80 = vld [vmem:[#allocation2 + $0x50] sm:$0xff]
    %v81 = vld [vmem:[#allocation2 + $0x58] sm:$0xff]
    %v82 = vld [vmem:[#allocation2 + $0x60] sm:$0xff]
    %v83 = vld [vmem:[#allocation2 + $0x68] sm:$0xff]
    %v84 = vld [vmem:[#allocation2 + $0x70] sm:$0xff]
    %v85 = vld [vmem:[#allocation2 + $0x78] sm:$0xff]
    %v86 = vld [vmem:[%s2] sm:$0x1]
    %v88 = vlaneseq
    %v89 = vshrl.u32 %v88, 7
    %v90 = vsub.s32 0, %v89
    %v91 = vrot.slane %v86, %v90
    %93 = vmatprep.subr.mxu0 0.0
    %94 = vmatpush1.msra.mxu0 %v70
    %95 = vmatprep.subr.mxu0 0.0
    %96 = vmatpush1.msra.mxu0 %v71
    %97 = vmatprep.subr.mxu0 0.0
    %98 = vmatpush1.msra.mxu0 %v72
    %99 = vmatprep.subr.mxu0 0.0
    %100 = vmatpush1.msra.mxu0 %v73
    %101 = vmatprep.subr.mxu0 0.0
    %102 = vmatpush1.msra.mxu0 %v74
    %103 = vmatprep.subr.mxu0 0.0
    %104 = vmatpush1.msra.mxu0 %v75
    %105 = vmatprep.subr.mxu0 0.0
    %106 = vmatpush1.msra.mxu0 %v76
    %107 = vmatprep.subr.mxu0 0.0
    %108 = vmatpush1.msra.mxu0 %v77
    %109 = vmatprep.subr.mxu0 0.0
    %110 = vmatpush1.msra.mxu0 %v78
    %111 = vmatprep.subr.mxu0 0.0
    %112 = vmatpush1.msra.mxu0 %v79
    %113 = vmatprep.subr.mxu0 0.0
    %114 = vmatpush1.msra.mxu0 %v80
    %115 = vmatprep.subr.mxu0 0.0
    %116 = vmatpush1.msra.mxu0 %v81
    %117 = vmatprep.subr.mxu0 0.0
    %118 = vmatpush1.msra.mxu0 %v82
    %119 = vmatprep.subr.mxu0 0.0
    %120 = vmatpush1.msra.mxu0 %v83
    %121 = vmatprep.subr.mxu0 0.0
    %122 = vmatpush1.msra.mxu0 %v84
    %123 = vmatprep.subr.mxu0 0.0
    %124 = vmatpush1.msra.mxu0 %v85
    %125 = vmatprep.subr.mxu0 0.0
    %126 = vmatpush1.msra.mxu0 0.0
    %127 = vmatprep.subr.mxu0 0.0
    %128 = vmatpush1.msra.mxu0 0.0
    %129 = vmatprep.subr.mxu0 0.0
    %130 = vmatpush1.msra.mxu0 0.0
    %131 = vmatprep.subr.mxu0 0.0
    %132 = vmatpush1.msra.mxu0 0.0
    %133 = vmatprep.subr.mxu0 0.0
    %134 = vmatpush1.msra.mxu0 0.0
    %135 = vmatprep.subr.mxu0 0.0
    %136 = vmatpush1.msra.mxu0 0.0
    %137 = vmatprep.subr.mxu0 0.0
    %138 = vmatpush1.msra.mxu0 0.0
    %139 = vmatprep.subr.mxu0 0.0
    %140 = vmatpush1.msra.mxu0 0.0
    %141 = vmatprep.subr.mxu0 0.0
    %142 = vmatpush1.msra.mxu0 0.0
    %143 = vmatprep.subr.mxu0 0.0
    %144 = vmatpush1.msra.mxu0 0.0
    %145 = vmatprep.subr.mxu0 0.0
    %146 = vmatpush1.msra.mxu0 0.0
    %147 = vmatprep.subr.mxu0 0.0
    %148 = vmatpush1.msra.mxu0 0.0
    %149 = vmatprep.subr.mxu0 0.0
    %150 = vmatpush1.msra.mxu0 0.0
    %151 = vmatprep.subr.mxu0 0.0
    %152 = vmatpush1.msra.mxu0 0.0
    %153 = vmatprep.subr.mxu0 0.0
    %154 = vmatpush1.msra.mxu0 0.0
    %155 = vmatprep.subr.mxu0 0.0
    %156 = vmatpush1.msra.mxu0 0.0
    %157 = vmatprep.mubr.f32.mxu0 0.0
    %158 = vmatmul.mubr.f32.gmra.mrb[0].mxu0 %v54
    %v159 = vpop.f32.mrb[0].mxu0
    %v160 = vadd.f32 %v91, %v159
    %v161 = vpop.f32.mrb[0].mxu0
    %162 = vmatprep.mubr.f32.mxu0 0.0
    %163 = vmatmul.mubr.f32.gmra.mrb[0].mxu0 %v55
    %v164 = vpop.f32.mrb[0].mxu0
    %v165 = vadd.f32 %v91, %v164
    %v166 = vpop.f32.mrb[0].mxu0
    %167 = vmatprep.mubr.f32.mxu0 0.0
    %168 = vmatmul.mubr.f32.gmra.mrb[0].mxu0 %v56
    %v169 = vpop.f32.mrb[0].mxu0
    %v170 = vadd.f32 %v91, %v169
    %v171 = vpop.f32.mrb[0].mxu0
    %172 = vmatprep.mubr.f32.mxu0 0.0
    %173 = vmatmul.mubr.f32.gmra.mrb[0].mxu0 %v57
    %v174 = vpop.f32.mrb[0].mxu0
    %v175 = vadd.f32 %v91, %v174
    %v176 = vpop.f32.mrb[0].mxu0
    %177 = vmatprep.mubr.f32.mxu0 0.0
    %178 = vmatmul.mubr.f32.gmra.mrb[0].mxu0 %v58
    %v179 = vpop.f32.mrb[0].mxu0
    %v180 = vadd.f32 %v91, %v179
    %v181 = vpop.f32.mrb[0].mxu0
    %182 = vmatprep.mubr.f32.mxu0 0.0
    %183 = vmatmul.mubr.f32.gmra.mrb[0].mxu0 %v59
    %v184 = vpop.f32.mrb[0].mxu0
    %v185 = vadd.f32 %v91, %v184
    %v186 = vpop.f32.mrb[0].mxu0
    %187 = vmatprep.mubr.f32.mxu0 0.0
    %188 = vmatmul.mubr.f32.gmra.mrb[0].mxu0 %v60
    %v189 = vpop.f32.mrb[0].mxu0
    %v190 = vadd.f32 %v91, %v189
    %v191 = vpop.f32.mrb[0].mxu0
    %192 = vmatprep.mubr.f32.mxu0 0.0
    %193 = vmatmul.mubr.f32.gmra.mrb[0].mxu0 %v61
    %v194 = vpop.f32.mrb[0].mxu0
    %v195 = vadd.f32 %v91, %v194
    %v196 = vpop.f32.mrb[0].mxu0
    %197 = vmatprep.mubr.f32.mxu0 0.0
    %198 = vmatmul.mubr.f32.gmra.mrb[0].mxu0 %v62
    %v199 = vpop.f32.mrb[0].mxu0
    %v200 = vadd.f32 %v91, %v199
    %v201 = vpop.f32.mrb[0].mxu0
    %202 = vmatprep.mubr.f32.mxu0 0.0
    %203 = vmatmul.mubr.f32.gmra.mrb[0].mxu0 %v63
    %v204 = vpop.f32.mrb[0].mxu0
    %v205 = vadd.f32 %v91, %v204
    %v206 = vpop.f32.mrb[0].mxu0
    %207 = vmatprep.mubr.f32.mxu0 0.0
    %208 = vmatmul.mubr.f32.gmra.mrb[0].mxu0 %v64
    %v209 = vpop.f32.mrb[0].mxu0
    %v210 = vadd.f32 %v91, %v209
    %v211 = vpop.f32.mrb[0].mxu0
    %212 = vmatprep.mubr.f32.mxu0 0.0
    %213 = vmatmul.mubr.f32.gmra.mrb[0].mxu0 %v65
    %v214 = vpop.f32.mrb[0].mxu0
    %v215 = vadd.f32 %v91, %v214
    %v216 = vpop.f32.mrb[0].mxu0
    %217 = vmatprep.mubr.f32.mxu0 0.0
    %218 = vmatmul.mubr.f32.gmra.mrb[0].mxu0 %v66
    %v219 = vpop.f32.mrb[0].mxu0
    %v220 = vadd.f32 %v91, %v219
    %v221 = vpop.f32.mrb[0].mxu0
    %222 = vmatprep.mubr.f32.mxu0 0.0
    %223 = vmatmul.mubr.f32.gmra.mrb[0].mxu0 %v67
    %v224 = vpop.f32.mrb[0].mxu0
    %v225 = vadd.f32 %v91, %v224
    %v226 = vpop.f32.mrb[0].mxu0
    %227 = vmatprep.mubr.f32.mxu0 0.0
    %228 = vmatmul.mubr.f32.gmra.mrb[0].mxu0 %v68
    %v229 = vpop.f32.mrb[0].mxu0
    %v230 = vadd.f32 %v91, %v229
    %v231 = vpop.f32.mrb[0].mxu0
    %232 = vmatprep.mubr.f32.mxu0 0.0
    %233 = vmatmul.mubr.f32.gmra.mrb[0].mxu0 %v69
    %v234 = vpop.f32.mrb[0].mxu0
    %v235 = vadd.f32 %v91, %v234
    %v236 = vpop.f32.mrb[0].mxu0
    %237 = vdwg.mxu0
    %v238 = vmax.f32 %v160, 0.0
    %v239 = vmax.f32 %v165, 0.0
    %v240 = vmax.f32 %v170, 0.0
    %v241 = vmax.f32 %v175, 0.0
    %v242 = vmax.f32 %v180, 0.0
    %v243 = vmax.f32 %v185, 0.0
    %v244 = vmax.f32 %v190, 0.0
    %v245 = vmax.f32 %v195, 0.0
    %v246 = vmax.f32 %v200, 0.0
    %v247 = vmax.f32 %v205, 0.0
    %v248 = vmax.f32 %v210, 0.0
    %v249 = vmax.f32 %v215, 0.0
    %v250 = vmax.f32 %v220, 0.0
    %v251 = vmax.f32 %v225, 0.0
    %v252 = vmax.f32 %v230, 0.0
    %v253 = vmax.f32 %v235, 0.0
    %v254 = vld [vmem:[%s5] sm:$0xff]
    %v255 = vld [vmem:[%s5 + $0x8] sm:$0xff]
    %v256 = vld [vmem:[%s5 + $0x10] sm:$0xff]
    %v257 = vld [vmem:[%s5 + $0x18] sm:$0xff]
    %v258 = vld [vmem:[%s5 + $0x20] sm:$0xff]
    %v259 = vld [vmem:[%s5 + $0x28] sm:$0xff]
    %v260 = vld [vmem:[%s5 + $0x30] sm:$0xff]
    %v261 = vld [vmem:[%s5 + $0x38] sm:$0xff]
    %v262 = vld [vmem:[%s5 + $0x40] sm:$0xff]
    %v263 = vld [vmem:[%s5 + $0x48] sm:$0xff]
    %v264 = vld [vmem:[%s5 + $0x50] sm:$0xff]
    %v265 = vld [vmem:[%s5 + $0x58] sm:$0xff]
    %v266 = vld [vmem:[%s5 + $0x60] sm:$0xff]
    %v267 = vld [vmem:[%s5 + $0x68] sm:$0xff]
    %v268 = vld [vmem:[%s5 + $0x70] sm:$0xff]
    %v269 = vld [vmem:[%s5 + $0x78] sm:$0xff]
    %v270 = vld [vmem:[%s3] sm:$0xff]
    %v271 = vld [vmem:[%s3 + $0x8] sm:$0xff]
    %v272 = vld [vmem:[%s3 + $0x10] sm:$0xff]
    %v273 = vld [vmem:[%s3 + $0x18] sm:$0xff]
    %v274 = vld [vmem:[%s3 + $0x20] sm:$0xff]
    %v275 = vld [vmem:[%s3 + $0x28] sm:$0xff]
    %v276 = vld [vmem:[%s3 + $0x30] sm:$0xff]
    %v277 = vld [vmem:[%s3 + $0x38] sm:$0xff]
    %v278 = vld [vmem:[%s3 + $0x40] sm:$0xff]
    %v279 = vld [vmem:[%s3 + $0x48] sm:$0xff]
    %v280 = vld [vmem:[%s3 + $0x50] sm:$0xff]
    %v281 = vld [vmem:[%s3 + $0x58] sm:$0xff]
    %v282 = vld [vmem:[%s3 + $0x60] sm:$0xff]
    %v283 = vld [vmem:[%s3 + $0x68] sm:$0xff]
    %v284 = vld [vmem:[%s3 + $0x70] sm:$0xff]
    %v285 = vld [vmem:[%s3 + $0x78] sm:$0xff]
    %286 = vmatprep.subr.mxu0 0.0
    %287 = vmatpush1.msra.mxu0 %v270
    %288 = vmatprep.subr.mxu0 0.0
    %289 = vmatpush1.msra.mxu0 %v271
    %290 = vmatprep.subr.mxu0 0.0
    %291 = vmatpush1.msra.mxu0 %v272
    %292 = vmatprep.subr.mxu0 0.0
    %293 = vmatpush1.msra.mxu0 %v273
    %294 = vmatprep.subr.mxu0 0.0
    %295 = vmatpush1.msra.mxu0 %v274
    %296 = vmatprep.subr.mxu0 0.0
    %297 = vmatpush1.msra.mxu0 %v275
    %298 = vmatprep.subr.mxu0 0.0
    %299 = vmatpush1.msra.mxu0 %v276
    %300 = vmatprep.subr.mxu0 0.0
    %301 = vmatpush1.msra.mxu0 %v277
    %302 = vmatprep.subr.mxu0 0.0
    %303 = vmatpush1.msra.mxu0 %v278
    %304 = vmatprep.subr.mxu0 0.0
    %305 = vmatpush1.msra.mxu0 %v279
    %306 = vmatprep.subr.mxu0 0.0
    %307 = vmatpush1.msra.mxu0 %v280
    %308 = vmatprep.subr.mxu0 0.0
    %309 = vmatpush1.msra.mxu0 %v281
    %310 = vmatprep.subr.mxu0 0.0
    %311 = vmatpush1.msra.mxu0 %v282
    %312 = vmatprep.subr.mxu0 0.0
    %313 = vmatpush1.msra.mxu0 %v283
    %314 = vmatprep.subr.mxu0 0.0
    %315 = vmatpush1.msra.mxu0 %v284
    %316 = vmatprep.subr.mxu0 0.0
    %317 = vmatpush1.msra.mxu0 %v285
    %318 = vmatprep.subr.mxu0 0.0
    %319 = vmatpush1.msra.mxu0 0.0
    %320 = vmatprep.subr.mxu0 0.0
    %321 = vmatpush1.msra.mxu0 0.0
    %322 = vmatprep.subr.mxu0 0.0
    %323 = vmatpush1.msra.mxu0 0.0
    %324 = vmatprep.subr.mxu0 0.0
    %325 = vmatpush1.msra.mxu0 0.0
    %326 = vmatprep.subr.mxu0 0.0
    %327 = vmatpush1.msra.mxu0 0.0
    %328 = vmatprep.subr.mxu0 0.0
    %329 = vmatpush1.msra.mxu0 0.0
    %330 = vmatprep.subr.mxu0 0.0
    %331 = vmatpush1.msra.mxu0 0.0
    %332 = vmatprep.subr.mxu0 0.0
    %333 = vmatpush1.msra.mxu0 0.0
    %334 = vmatprep.subr.mxu0 0.0
    %335 = vmatpush1.msra.mxu0 0.0
    %336 = vmatprep.subr.mxu0 0.0
    %337 = vmatpush1.msra.mxu0 0.0
    %338 = vmatprep.subr.mxu0 0.0
    %339 = vmatpush1.msra.mxu0 0.0
    %340 = vmatprep.subr.mxu0 0.0
    %341 = vmatpush1.msra.mxu0 0.0
    %342 = vmatprep.subr.mxu0 0.0
    %343 = vmatpush1.msra.mxu0 0.0
    %344 = vmatprep.subr.mxu0 0.0
    %345 = vmatpush1.msra.mxu0 0.0
    %346 = vmatprep.subr.mxu0 0.0
    %347 = vmatpush1.msra.mxu0 0.0
    %348 = vmatprep.subr.mxu0 0.0
    %349 = vmatpush1.msra.mxu0 0.0
    %350 = vmatprep.mubr.f32.mxu0 0.0
    %351 = vmatmul.mubr.f32.gmra.mrb[0].mxu0 %v238
    %v352 = vpop.f32.mrb[0].mxu0
    %v353 = vadd.f32 0.0, %v352
    %v354 = vpop.f32.mrb[0].mxu0
    %355 = vmatprep.mubr.f32.mxu0 0.0
    %356 = vmatmul.mubr.f32.gmra.mrb[0].mxu0 %v239
    %v357 = vpop.f32.mrb[0].mxu0
    %v358 = vadd.f32 0.0, %v357
    %v359 = vpop.f32.mrb[0].mxu0
    %360 = vmatprep.mubr.f32.mxu0 0.0
    %361 = vmatmul.mubr.f32.gmra.mrb[0].mxu0 %v240
    %v362 = vpop.f32.mrb[0].mxu0
    %v363 = vadd.f32 0.0, %v362
    %v364 = vpop.f32.mrb[0].mxu0
    %365 = vmatprep.mubr.f32.mxu0 0.0
    %366 = vmatmul.mubr.f32.gmra.mrb[0].mxu0 %v241
    %v367 = vpop.f32.mrb[0].mxu0
    %v368 = vadd.f32 0.0, %v367
    %v369 = vpop.f32.mrb[0].mxu0
    %370 = vmatprep.mubr.f32.mxu0 0.0
    %371 = vmatmul.mubr.f32.gmra.mrb[0].mxu0 %v242
    %v372 = vpop.f32.mrb[0].mxu0
    %v373 = vadd.f32 0.0, %v372
    %v374 = vpop.f32.mrb[0].mxu0
    %375 = vmatprep.mubr.f32.mxu0 0.0
    %376 = vmatmul.mubr.f32.gmra.mrb[0].mxu0 %v243
    %v377 = vpop.f32.mrb[0].mxu0
    %v378 = vadd.f32 0.0, %v377
    %v379 = vpop.f32.mrb[0].mxu0
    %380 = vmatprep.mubr.f32.mxu0 0.0
    %381 = vmatmul.mubr.f32.gmra.mrb[0].mxu0 %v244
    %v382 = vpop.f32.mrb[0].mxu0
    %v383 = vadd.f32 0.0, %v382
    %v384 = vpop.f32.mrb[0].mxu0
    %385 = vmatprep.mubr.f32.mxu0 0.0
    %386 = vmatmul.mubr.f32.gmra.mrb[0].mxu0 %v245
    %v387 = vpop.f32.mrb[0].mxu0
    %v388 = vadd.f32 0.0, %v387
    %v389 = vpop.f32.mrb[0].mxu0
    %390 = vmatprep.mubr.f32.mxu0 0.0
    %391 = vmatmul.mubr.f32.gmra.mrb[0].mxu0 %v246
    %v392 = vpop.f32.mrb[0].mxu0
    %v393 = vadd.f32 0.0, %v392
    %v394 = vpop.f32.mrb[0].mxu0
    %395 = vmatprep.mubr.f32.mxu0 0.0
    %396 = vmatmul.mubr.f32.gmra.mrb[0].mxu0 %v247
    %v397 = vpop.f32.mrb[0].mxu0
    %v398 = vadd.f32 0.0, %v397
    %v399 = vpop.f32.mrb[0].mxu0
    %400 = vmatprep.mubr.f32.mxu0 0.0
    %401 = vmatmul.mubr.f32.gmra.mrb[0].mxu0 %v248
    %v402 = vpop.f32.mrb[0].mxu0
    %v403 = vadd.f32 0.0, %v402
    %v404 = vpop.f32.mrb[0].mxu0
    %405 = vmatprep.mubr.f32.mxu0 0.0
    %406 = vmatmul.mubr.f32.gmra.mrb[0].mxu0 %v249
    %v407 = vpop.f32.mrb[0].mxu0
    %v408 = vadd.f32 0.0, %v407
    %v409 = vpop.f32.mrb[0].mxu0
    %410 = vmatprep.mubr.f32.mxu0 0.0
    %411 = vmatmul.mubr.f32.gmra.mrb[0].mxu0 %v250
    %v412 = vpop.f32.mrb[0].mxu0
    %v413 = vadd.f32 0.0, %v412
    %v414 = vpop.f32.mrb[0].mxu0
    %415 = vmatprep.mubr.f32.mxu0 0.0
    %416 = vmatmul.mubr.f32.gmra.mrb[0].mxu0 %v251
    %v417 = vpop.f32.mrb[0].mxu0
    %v418 = vadd.f32 0.0, %v417
    %v419 = vpop.f32.mrb[0].mxu0
    %420 = vmatprep.mubr.f32.mxu0 0.0
    %421 = vmatmul.mubr.f32.gmra.mrb[0].mxu0 %v252
    %v422 = vpop.f32.mrb[0].mxu0
    %v423 = vadd.f32 0.0, %v422
    %v424 = vpop.f32.mrb[0].mxu0
    %425 = vmatprep.mubr.f32.mxu0 0.0
    %426 = vmatmul.mubr.f32.gmra.mrb[0].mxu0 %v253
    %v427 = vpop.f32.mrb[0].mxu0
    %v428 = vadd.f32 0.0, %v427
    %v429 = vpop.f32.mrb[0].mxu0
    %430 = vdwg.mxu0
    %v431 = vadd.f32 %v254, %v353
    %v432 = vadd.f32 %v255, %v358
    %v433 = vadd.f32 %v256, %v363
    %v434 = vadd.f32 %v257, %v368
    %v435 = vadd.f32 %v258, %v373
    %v436 = vadd.f32 %v259, %v378
    %v437 = vadd.f32 %v260, %v383
    %v438 = vadd.f32 %v261, %v388
    %v439 = vadd.f32 %v262, %v393
    %v440 = vadd.f32 %v263, %v398
    %v441 = vadd.f32 %v264, %v403
    %v442 = vadd.f32 %v265, %v408
    %v443 = vadd.f32 %v266, %v413
    %v444 = vadd.f32 %v267, %v418
    %v445 = vadd.f32 %v268, %v423
    %v446 = vadd.f32 %v269, %v428
    %447 = vst [vmem:[%s5] sm:$0xff] %v431
    %448 = vst [vmem:[%s5 + $0x8] sm:$0xff] %v432
    %449 = vst [vmem:[%s5 + $0x10] sm:$0xff] %v433
    %450 = vst [vmem:[%s5 + $0x18] sm:$0xff] %v434
    %451 = vst [vmem:[%s5 + $0x20] sm:$0xff] %v435
    %452 = vst [vmem:[%s5 + $0x28] sm:$0xff] %v436
    %453 = vst [vmem:[%s5 + $0x30] sm:$0xff] %v437
    %454 = vst [vmem:[%s5 + $0x38] sm:$0xff] %v438
    %455 = vst [vmem:[%s5 + $0x40] sm:$0xff] %v439
    %456 = vst [vmem:[%s5 + $0x48] sm:$0xff] %v440
    %457 = vst [vmem:[%s5 + $0x50] sm:$0xff] %v441
    %458 = vst [vmem:[%s5 + $0x58] sm:$0xff] %v442
    %459 = vst [vmem:[%s5 + $0x60] sm:$0xff] %v443
    %460 = vst [vmem:[%s5 + $0x68] sm:$0xff] %v444
    %461 = vst [vmem:[%s5 + $0x70] sm:$0xff] %v445
    %462 = vst [vmem:[%s5 + $0x78] sm:$0xff] %v446
    // Predicated region
    $region30: #{apply.1} parent=1 // pred_check
      %p463 = pneg %p34
    $region31: #{apply.1} parent=1 // pred_check_branch
      %465 = sbr.rel (%p463) target = $region33
    $region32: #{apply.1} parent=1 // pred_region
      %v466 = vld [vmem:[%s5] sm:$0xff]
      %v467 = vld [vmem:[%s5 + $0x8] sm:$0xff]
      %v468 = vld [vmem:[%s5 + $0x10] sm:$0xff]
      %v469 = vld [vmem:[%s5 + $0x18] sm:$0xff]
      %v470 = vld [vmem:[%s5 + $0x20] sm:$0xff]
      %v471 = vld [vmem:[%s5 + $0x28] sm:$0xff]
      %v472 = vld [vmem:[%s5 + $0x30] sm:$0xff]
      %v473 = vld [vmem:[%s5 + $0x38] sm:$0xff]
      %v474 = vld [vmem:[%s5 + $0x40] sm:$0xff]
      %v475 = vld [vmem:[%s5 + $0x48] sm:$0xff]
      %v476 = vld [vmem:[%s5 + $0x50] sm:$0xff]
      %v477 = vld [vmem:[%s5 + $0x58] sm:$0xff]
      %v478 = vld [vmem:[%s5 + $0x60] sm:$0xff]
      %v479 = vld [vmem:[%s5 + $0x68] sm:$0xff]
      %v480 = vld [vmem:[%s5 + $0x70] sm:$0xff]
      %v481 = vld [vmem:[%s5 + $0x78] sm:$0xff]
      %v482 = vld [vmem:[%s4] sm:$0x1]
      %v484 = vlaneseq
      %v485 = vshrl.u32 %v484, 7
      %v486 = vsub.s32 0, %v485
      %v487 = vrot.slane %v482, %v486
      %v489 = vadd.f32 %v466, %v487
      %v490 = vadd.f32 %v467, %v487
      %v491 = vadd.f32 %v468, %v487
      %v492 = vadd.f32 %v469, %v487
      %v493 = vadd.f32 %v470, %v487
      %v494 = vadd.f32 %v471, %v487
      %v495 = vadd.f32 %v472, %v487
      %v496 = vadd.f32 %v473, %v487
      %v497 = vadd.f32 %v474, %v487
      %v498 = vadd.f32 %v475, %v487
      %v499 = vadd.f32 %v476, %v487
      %v500 = vadd.f32 %v477, %v487
      %v501 = vadd.f32 %v478, %v487
      %v502 = vadd.f32 %v479, %v487
      %v503 = vadd.f32 %v480, %v487
      %v504 = vadd.f32 %v481, %v487
      %505 = vst [vmem:[%s5] sm:$0xff] %v489
      %506 = vst [vmem:[%s5 + $0x8] sm:$0xff] %v490
      %507 = vst [vmem:[%s5 + $0x10] sm:$0xff] %v491
      %508 = vst [vmem:[%s5 + $0x18] sm:$0xff] %v492
      %509 = vst [vmem:[%s5 + $0x20] sm:$0xff] %v493
      %510 = vst [vmem:[%s5 + $0x28] sm:$0xff] %v494
      %511 = vst [vmem:[%s5 + $0x30] sm:$0xff] %v495
      %512 = vst [vmem:[%s5 + $0x38] sm:$0xff] %v496
      %513 = vst [vmem:[%s5 + $0x40] sm:$0xff] %v497
      %514 = vst [vmem:[%s5 + $0x48] sm:$0xff] %v498
      %515 = vst [vmem:[%s5 + $0x50] sm:$0xff] %v499
      %516 = vst [vmem:[%s5 + $0x58] sm:$0xff] %v500
      %517 = vst [vmem:[%s5 + $0x60] sm:$0xff] %v501
      %518 = vst [vmem:[%s5 + $0x68] sm:$0xff] %v502
      %519 = vst [vmem:[%s5 + $0x70] sm:$0xff] %v503
      %520 = vst [vmem:[%s5 + $0x78] sm:$0xff] %v504
    $region33: #{apply.1} parent=1 // pred_fallthru
      _
    // Predicated region
    $region34: #{apply.1} parent=1 // pred_check
      _
    $region35: #{apply.1} parent=1 // pred_check_branch
      %522 = sbr.rel (0) target = $region37
    $region36: #{apply.1} parent=1 // pred_region
      _
    $region37: #{apply.1} parent=1 // pred_fallthru
      _
    // Predicated region
    $region38: #{apply.1} parent=1 // pred_check
      _
    $region39: #{apply.1} parent=1 // pred_check_branch
      %524 = sbr.rel (0) target = $region41
    $region40: #{apply.1} parent=1 // pred_region
      _
    $region41: #{apply.1} parent=1 // pred_fallthru
      _
    %525 = vsyncpa [#allocation3], 1

</llo_original>
